<compile_context>
chip_gen: v6e
topology: v6e:2x2x1
jax: 0.10.0
libtpu: 0.0.40
codegen_flags: <defaults>
</compile_context>

<pallas_src>
import functools

import jax
import jax.numpy as jnp
from jax import lax
from jax.experimental import pallas as pl
from jax.experimental.pallas import tpu as pltpu

ALPHA = 0.2  # module default classification weight


def _round_up(x, m):
    return ((x + m - 1) // m) * m


def _nll_kernel(yp_ref, yt_ref, an_ref, lp_ref, out_ref, *,
                n_nodes, num_modes, op_len, tile_n, alpha):
    """One N-tile of the multipath NLL loss.

    Flat lane-dense layout: trailing axis of yp/an is L = M*2*T with lane index
    l = m*(2T) + 2t + c  (c = 0 for x, 1 for y).
    """
    M = num_modes
    T = op_len
    L = M * 2 * T
    TN = tile_n

    yp = yp_ref[...]                    # [TN, L]
    yt = yt_ref[...]                    # [TN, 2T]
    an = an_ref[...]                    # [1,  L]
    lp = lp_ref[...]                    # [TN, M]

    # Tile y_true across the M mode blocks so it lines up with the flat layout.
    yt_t = jnp.concatenate([yt] * M, axis=-1)           # [TN, L]

    # ---- mode selection: dist[n, m] = sum_t || anchors[m,t] - y_true[n,t] ||_2
    d = an - yt_t                                       # [TN, L]  (full lane density)
    sq = d * d                                          # [TN, L]

    # pair[n, k] = sq[n, 2k] + sq[n, 2k+1], k = m*T + t   (constant 0/1 matrix, MXU)
    row = lax.broadcasted_iota(jnp.int32, (L, M * T), 0)
    col = lax.broadcasted_iota(jnp.int32, (L, M * T), 1)
    pair_mat = ((row == 2 * col) | (row == 2 * col + 1)).astype(jnp.float32)
    pair = jnp.dot(sq, pair_mat, preferred_element_type=jnp.float32)   # [TN, M*T]
    norm = jnp.sqrt(pair)                                              # [TN, M*T]

    # per-mode block sum -> dist[n, m]  (constant 0/1 segment matrix, MXU)
    krow = lax.broadcasted_iota(jnp.int32, (M * T, M), 0)
    kcol = lax.broadcasted_iota(jnp.int32, (M * T, M), 1)
    blk_mat = ((krow >= kcol * T) & (krow < (kcol + 1) * T)).astype(jnp.float32)
    dist = jnp.dot(norm, blk_mat, preferred_element_type=jnp.float32)  # [TN, M]

    nearest = jnp.argmin(dist, axis=-1, keepdims=True)                 # [TN, 1] int32

    # ---- classification: -log_probs[n, nearest]
    mode_iota = lax.broadcasted_iota(jnp.int32, (TN, M), 1)
    onehot_m = mode_iota == nearest                                    # [TN, M]
    # select (not multiply) so -inf log-probs of non-selected modes stay out.
    loss_cls = -jnp.sum(jnp.where(onehot_m, lp, 0.0), axis=-1, keepdims=True)

    # ---- regression: mean_t || y_true - (y_pred + anchors)[nearest] ||^2
    lane_iota = lax.broadcasted_iota(jnp.int32, (TN, L), 1)
    lo = nearest * (2 * T)
    onehot_l = (lane_iota >= lo) & (lane_iota < lo + 2 * T)            # [TN, L]
    res = yt_t - yp - an                                               # [TN, L]
    loss_reg = jnp.sum(jnp.where(onehot_l, res * res, 0.0),
                       axis=-1, keepdims=True) / jnp.float32(T)        # [TN, 1]

    per_node = loss_reg + alpha * loss_cls                             # [TN, 1]

    # Mask padded rows of the (possibly ragged) last tile.
    row_iota = lax.broadcasted_iota(jnp.int32, (TN, 1), 0)
    valid = (pl.program_id(0) * TN + row_iota) < n_nodes
    per_node = jnp.where(valid, per_node, 0.0)

    # Per-tile partial sum; final mean happens in the wrapper.
    partial = jnp.sum(per_node)
    out_ref[...] = jnp.broadcast_to(partial, (1, 8, 128))


def nll_loss_pallas(y_pred, y_true, log_probs, anchors, alpha=ALPHA, tile_n=512):
    """
    y_pred:    [N, M, T, 2]
    y_true:    [N, T, 2]
    log_probs: [N, M]
    anchors:   [M, T, 2]
    returns scalar loss (float32)
    """
    y_pred = y_pred.astype(jnp.float32)
    y_true = y_true.astype(jnp.float32)
    log_probs = log_probs.astype(jnp.float32)
    anchors = anchors.astype(jnp.float32)

    N, M, T, _ = y_pred.shape
    L = M * 2 * T

    # Contiguous reshapes only (no strided coordinate splits -> no HBM copies).
    yp2 = y_pred.reshape(N, L)          # [N, M*2T]   (= [N, 128] for M=4, T=16)
    yt2 = y_true.reshape(N, 2 * T)      # [N, 2T]
    an2 = anchors.reshape(1, L)         # [1, M*2T]

    TN = min(tile_n, _round_up(N, 8))   # sublane-aligned N tile
    G = pl.cdiv(N, TN)

    kernel = functools.partial(
        _nll_kernel, n_nodes=N, num_modes=M, op_len=T, tile_n=TN, alpha=alpha)

    partials = pl.pallas_call(
        kernel,
        out_shape=jax.ShapeDtypeStruct((G, 8, 128), jnp.float32),
        grid=(G,),
        in_specs=[
            pl.BlockSpec((TN, L), lambda i: (i, 0)),        # y_pred (flat)
            pl.BlockSpec((TN, 2 * T), lambda i: (i, 0)),    # y_true (flat)
            pl.BlockSpec((1, L), lambda i: (0, 0)),         # anchors (resident)
            pl.BlockSpec((TN, M), lambda i: (i, 0)),        # log_probs
        ],
        out_specs=pl.BlockSpec((1, 8, 128), lambda i: (i, 0, 0)),
        compiler_params=pltpu.CompilerParams(
            dimension_semantics=("parallel",),
            vmem_limit_bytes=32 * 1024 * 1024,
        ),
    )(yp2, yt2, an2, log_probs)

    return jnp.sum(partials[:, 0, 0]) / jnp.float32(N)


def nll_loss_ref(y_pred, y_true, log_probs, anchors, alpha=ALPHA):
    """Pure-JAX reference mirroring the PyTorch forward."""
    n = y_true.shape[0]
    dist = jnp.sum(
        jnp.linalg.norm(anchors[None] - y_true[:, None], axis=-1), axis=-1)
    nearest = jnp.argmin(dist, axis=-1)
    loss_cls = -log_probs[jnp.arange(n), nearest]
    traj_xy = y_pred + anchors[None]
    nearest_trajs = traj_xy[jnp.arange(n), nearest]
    res = y_true - nearest_trajs
    loss_reg = jnp.mean(jnp.square(res[:, :, 0]) + jnp.square(res[:, :, 1]),
                        axis=-1)
    return jnp.mean(loss_reg + alpha * loss_cls)


if __name__ == "__main__":
    # Small, deterministic shapes consistent with the module's forward.
    N, M, T = 8, 4, 16  # num_nodes, num_modes, op_len

    key = jax.random.PRNGKey(0)
    k1, k2, k3, k4 = jax.random.split(key, 4)

    y_pred = jax.random.normal(k1, (N, M, T, 2), dtype=jnp.float32)
    y_true = jax.random.normal(k2, (N, T, 2), dtype=jnp.float32)
    anchors = jax.random.normal(k3, (M, T, 2), dtype=jnp.float32)
    logits = jax.random.normal(k4, (N, M), dtype=jnp.float32)
    log_probs = jax.nn.log_softmax(logits, axis=-1)

    loss = jax.block_until_ready(nll_loss_pallas(y_pred, y_true, log_probs, anchors))
    ref = jax.block_until_ready(nll_loss_ref(y_pred, y_true, log_probs, anchors))
    assert jnp.allclose(loss, ref, rtol=1e-5, atol=1e-5), (loss, ref)

    print("KERNEL_OK")
</pallas_src>

<mosaic_0001>
module attributes {stable_mosaic.version = 11 : i64} {
  func.func @_nll_kernel(%arg0: i32, %arg1: memref<8x128xf32, #tpu.memory_space<vmem>>, %arg2: memref<8x32xf32, #tpu.memory_space<vmem>>, %arg3: memref<1x128xf32, #tpu.memory_space<vmem>>, %arg4: memref<8x4xf32, #tpu.memory_space<vmem>>, %arg5: memref<1x8x128xf32, #tpu.memory_space<vmem>>) attributes {dimension_semantics = [#tpu.dimension_semantics<parallel>], iteration_bounds = array<i64: 1>, scalar_prefetch = 0 : i64, scratch_operands = 0 : i64, tpu.core_type = #tpu.core_type<tc>, window_params = [{transform_indices = @transform_0, window_bounds = array<i64: 8, 128>}, {transform_indices = @transform_1, window_bounds = array<i64: 8, 32>}, {pipeline_mode = #tpu.pipeline_mode<synchronous>, transform_indices = @transform_2, window_bounds = array<i64: 1, 128>}, {transform_indices = @transform_3, window_bounds = array<i64: 8, 4>}, {transform_indices = @transform_4, window_bounds = array<i64: 1, 8, 128>}]} {
    %c0 = arith.constant 0 : index
    %c0_0 = arith.constant 0 : index
    %0 = vector.load %arg1[%c0, %c0_0] : memref<8x128xf32, #tpu.memory_space<vmem>>, vector<8x128xf32>
    %c0_1 = arith.constant 0 : index
    %c0_2 = arith.constant 0 : index
    %1 = vector.load %arg2[%c0_1, %c0_2] : memref<8x32xf32, #tpu.memory_space<vmem>>, vector<8x32xf32>
    %c0_3 = arith.constant 0 : index
    %c0_4 = arith.constant 0 : index
    %2 = vector.load %arg3[%c0_3, %c0_4] : memref<1x128xf32, #tpu.memory_space<vmem>>, vector<1x128xf32>
    %c0_5 = arith.constant 0 : index
    %c0_6 = arith.constant 0 : index
    %3 = vector.load %arg4[%c0_5, %c0_6] : memref<8x4xf32, #tpu.memory_space<vmem>>, vector<8x4xf32>
    %4 = tpu.concatenate %1, %1, %1, %1 in 1 : vector<8x32xf32>, vector<8x32xf32>, vector<8x32xf32>, vector<8x32xf32> -> vector<8x128xf32>
    %5 = vector.broadcast %2 : vector<1x128xf32> to vector<8x128xf32>
    %6 = arith.subf %5, %4 : vector<8x128xf32>
    %7 = arith.mulf %6, %6 : vector<8x128xf32>
    %8 = tpu.iota {dimensions = array<i32: 0>} : vector<128x64xi32>
    %9 = tpu.iota {dimensions = array<i32: 1>} : vector<128x64xi32>
    %c2_i32 = arith.constant 2 : i32
    %10 = vector.broadcast %c2_i32 : i32 to vector<128x64xi32>
    %11 = arith.muli %10, %9 : vector<128x64xi32>
    %12 = arith.cmpi eq, %8, %11 : vector<128x64xi32>
    %c2_i32_7 = arith.constant 2 : i32
    %13 = vector.broadcast %c2_i32_7 : i32 to vector<128x64xi32>
    %14 = arith.muli %13, %9 : vector<128x64xi32>
    %c1_i32 = arith.constant 1 : i32
    %15 = vector.broadcast %c1_i32 : i32 to vector<128x64xi32>
    %16 = arith.addi %14, %15 : vector<128x64xi32>
    %17 = arith.cmpi eq, %8, %16 : vector<128x64xi32>
    %18 = arith.ori %12, %17 : vector<128x64xi1>
    %19 = arith.extui %18 : vector<128x64xi1> to vector<128x64xi32>
    %20 = arith.sitofp %19 : vector<128x64xi32> to vector<128x64xf32>
    %cst = arith.constant dense<0.000000e+00> : vector<8x64xf32>
    %21 = tpu.matmul %7, %20, %cst {dimension_numbers = #tpu.dot_dimension_numbers<[1], [0], [0], [1], [0, 0, 1, 1], [], []>} : vector<8x128xf32>, vector<128x64xf32>, vector<8x64xf32> -> vector<8x64xf32>
    %22 = math.sqrt %21 : vector<8x64xf32>
    %23 = tpu.iota {dimensions = array<i32: 0>} : vector<64x4xi32>
    %24 = tpu.iota {dimensions = array<i32: 1>} : vector<64x4xi32>
    %c16_i32 = arith.constant 16 : i32
    %25 = vector.broadcast %c16_i32 : i32 to vector<64x4xi32>
    %26 = arith.muli %24, %25 : vector<64x4xi32>
    %27 = arith.cmpi sge, %23, %26 : vector<64x4xi32>
    %c1_i32_8 = arith.constant 1 : i32
    %28 = vector.broadcast %c1_i32_8 : i32 to vector<64x4xi32>
    %29 = arith.addi %24, %28 : vector<64x4xi32>
    %c16_i32_9 = arith.constant 16 : i32
    %30 = vector.broadcast %c16_i32_9 : i32 to vector<64x4xi32>
    %31 = arith.muli %29, %30 : vector<64x4xi32>
    %32 = arith.cmpi slt, %23, %31 : vector<64x4xi32>
    %33 = arith.andi %27, %32 : vector<64x4xi1>
    %34 = arith.extui %33 : vector<64x4xi1> to vector<64x4xi32>
    %35 = arith.sitofp %34 : vector<64x4xi32> to vector<64x4xf32>
    %cst_10 = arith.constant dense<0.000000e+00> : vector<8x4xf32>
    %36 = tpu.matmul %22, %35, %cst_10 {dimension_numbers = #tpu.dot_dimension_numbers<[1], [0], [0], [1], [0, 0, 1, 1], [], []>} : vector<8x64xf32>, vector<64x4xf32>, vector<8x4xf32> -> vector<8x4xf32>
    %37 = tpu.reduce_index %36 {axis = 1 : i32, kind = #tpu.reduction_kind<arg_min>} : vector<8x4xf32> -> vector<8xi32>
    %38 = vector.shape_cast %37 : vector<8xi32> to vector<8x1xi32>
    %39 = tpu.iota {dimensions = array<i32: 1>} : vector<8x4xi32>
    %40 = vector.broadcast %38 : vector<8x1xi32> to vector<8x4xi32>
    %41 = arith.cmpi eq, %39, %40 : vector<8x4xi32>
    %cst_11 = arith.constant 0.000000e+00 : f32
    %42 = vector.broadcast %cst_11 : f32 to vector<8x4xf32>
    %43 = arith.select %41, %3, %42 : vector<8x4xi1>, vector<8x4xf32>
    %cst_12 = arith.constant dense<0.000000e+00> : vector<8xf32>
    %44 = vector.multi_reduction <add>, %43, %cst_12 [1] : vector<8x4xf32> to vector<8xf32>
    %45 = vector.shape_cast %44 : vector<8xf32> to vector<8x1xf32>
    %cst_13 = arith.constant 0.000000e+00 : f32
    %46 = vector.broadcast %cst_13 : f32 to vector<8x1xf32>
    %47 = arith.subf %46, %45 : vector<8x1xf32>
    %48 = tpu.iota {dimensions = array<i32: 1>} : vector<8x128xi32>
    %c32_i32 = arith.constant 32 : i32
    %49 = vector.broadcast %c32_i32 : i32 to vector<8x1xi32>
    %50 = arith.muli %38, %49 : vector<8x1xi32>
    %51 = vector.broadcast %50 : vector<8x1xi32> to vector<8x128xi32>
    %52 = arith.cmpi sge, %48, %51 : vector<8x128xi32>
    %c32_i32_14 = arith.constant 32 : i32
    %53 = vector.broadcast %c32_i32_14 : i32 to vector<8x1xi32>
    %54 = arith.addi %50, %53 : vector<8x1xi32>
    %55 = vector.broadcast %54 : vector<8x1xi32> to vector<8x128xi32>
    %56 = arith.cmpi slt, %48, %55 : vector<8x128xi32>
    %57 = arith.andi %52, %56 : vector<8x128xi1>
    %58 = arith.subf %4, %0 : vector<8x128xf32>
    %59 = vector.broadcast %2 : vector<1x128xf32> to vector<8x128xf32>
    %60 = arith.subf %58, %59 : vector<8x128xf32>
    %61 = arith.mulf %60, %60 : vector<8x128xf32>
    %cst_15 = arith.constant 0.000000e+00 : f32
    %62 = vector.broadcast %cst_15 : f32 to vector<8x128xf32>
    %63 = arith.select %57, %61, %62 : vector<8x128xi1>, vector<8x128xf32>
    %cst_16 = arith.constant dense<0.000000e+00> : vector<8xf32>
    %64 = vector.multi_reduction <add>, %63, %cst_16 [1] : vector<8x128xf32> to vector<8xf32>
    %65 = vector.shape_cast %64 : vector<8xf32> to vector<8x1xf32>
    %cst_17 = arith.constant 1.600000e+01 : f32
    %66 = vector.broadcast %cst_17 : f32 to vector<8x1xf32>
    %67 = arith.divf %65, %66 : vector<8x1xf32>
    %cst_18 = arith.constant 2.000000e-01 : f32
    %68 = vector.broadcast %cst_18 : f32 to vector<8x1xf32>
    %69 = arith.mulf %68, %47 : vector<8x1xf32>
    %70 = arith.addf %67, %69 : vector<8x1xf32>
    %71 = tpu.iota {dimensions = array<i32: 0>} : vector<8x1xi32>
    %c8_i32 = arith.constant 8 : i32
    %72 = arith.muli %arg0, %c8_i32 : i32
    %73 = vector.broadcast %72 : i32 to vector<8x1xi32>
    %74 = arith.addi %73, %71 : vector<8x1xi32>
    %c8_i32_19 = arith.constant 8 : i32
    %75 = vector.broadcast %c8_i32_19 : i32 to vector<8x1xi32>
    %76 = arith.cmpi slt, %74, %75 : vector<8x1xi32>
    %cst_20 = arith.constant 0.000000e+00 : f32
    %77 = vector.broadcast %cst_20 : f32 to vector<8x1xf32>
    %78 = arith.select %76, %70, %77 : vector<8x1xi1>, vector<8x1xf32>
    %79 = vector.shape_cast %78 : vector<8x1xf32> to vector<1x8x1xf32>
    %cst_21 = arith.constant dense<0.000000e+00> : vector<1xf32>
    %80 = vector.multi_reduction <add>, %79, %cst_21 [1, 2] : vector<1x8x1xf32> to vector<1xf32>
    %81 = vector.shape_cast %80 : vector<1xf32> to vector<1x1x1xf32>
    %82 = vector.extract %81[0, 0, 0] : f32 from vector<1x1x1xf32>
    %83 = vector.broadcast %82 : f32 to vector<1x8x128xf32>
    %c0_22 = arith.constant 0 : index
    %c0_23 = arith.constant 0 : index
    %c0_24 = arith.constant 0 : index
    %84 = vector.load %arg5[%c0_22, %c0_23, %c0_24] : memref<1x8x128xf32, #tpu.memory_space<vmem>>, vector<1x8x128xf32>
    tpu.vector_store %arg5[%c0_22, %c0_23, %c0_24], %83 {strides = array<i32>} : memref<1x8x128xf32, #tpu.memory_space<vmem>>, vector<1x8x128xf32>,
    return
  }
  func.func @transform_0(%arg0: i32) -> (i32, i32) {
    %c0_i32 = arith.constant 0 : i32
    %c0_i32_0 = arith.constant 0 : i32
    return %arg0, %c0_i32 : i32, i32
  }
  func.func @transform_1(%arg0: i32) -> (i32, i32) {
    %c0_i32 = arith.constant 0 : i32
    %c0_i32_0 = arith.constant 0 : i32
    return %arg0, %c0_i32 : i32, i32
  }
  func.func @transform_2(%arg0: i32) -> (i32, i32) {
    %c0_i32 = arith.constant 0 : i32
    %c0_i32_0 = arith.constant 0 : i32
    %c0_i32_1 = arith.constant 0 : i32
    return %c0_i32, %c0_i32_0 : i32, i32
  }
  func.func @transform_3(%arg0: i32) -> (i32, i32) {
    %c0_i32 = arith.constant 0 : i32
    %c0_i32_0 = arith.constant 0 : i32
    return %arg0, %c0_i32 : i32, i32
  }
  func.func @transform_4(%arg0: i32) -> (i32, i32, i32) {
    %c0_i32 = arith.constant 0 : i32
    %c0_i32_0 = arith.constant 0 : i32
    %c0_i32_1 = arith.constant 0 : i32
    return %arg0, %c0_i32, %c0_i32_0 : i32, i32, i32
  }
}

</mosaic_0001>

<llo_original>
// kernel: tpu_custom_call.1
$region0: #{tpu_custom_call.1}
  #allocation0 [shape = 'u32[]', space=smem, size = 0x4, offset = 0x4, fixed_abs, tag = 'smem constant byte address 0x4 - core index']
  #allocation1 [shape = 'u32[144,128]{1,0:T(1,128)}', space=vmem, size = 0x12000, scoped, tag = 'internal scratch']
  %s0 = inlined_call_operand.vmem [shape: f32[8,128], index: 0, kind: input, shape index: {}]
  %s1 = inlined_call_operand.hbm [shape: f32[8,32], index: 1, kind: input, shape index: {}]
  %s2 = inlined_call_operand.vmem [shape: f32[1,128], index: 2, kind: input, shape index: {}]
  %s3 = inlined_call_operand.vmem [shape: f32[8,4], index: 3, kind: input, shape index: {}]
  %s4 = inlined_call_operand.hbm [shape: f32[1,8,128], index: 4, kind: output, shape index: {}]
  %s5 = sld [smem:[#allocation0]]
  $region30: #{tpu_custom_call.1} parent=0
    _
  %s7 = ssub.s32 1, %s5
  %s8 = scalar_select 0, %s7, %s5
  $region1: #{tpu_custom_call.1} parent=0
    #allocation2 [shape = 'u8[4096]{0}', space=vmem, size = 0x1000, scoped, tag = 'input window, operand 1, single buffered']
    #allocation3 [shape = 's32[1]{0}', space=sflag, size = 0x4, scoped, tag = 'scoped memory for tpu_custom_call.1']
    #allocation4 [shape = 's32[1]{0}', space=sflag, size = 0x4, scoped, tag = 'scoped memory for tpu_custom_call.1']
    #allocation5 [shape = 'u8[4096]{0}', space=vmem, size = 0x1000, scoped, tag = 'output window, operand 0, single buffered']
    %9 = vsyncpa [#allocation3], 0
    %10 = vsyncpa [#allocation4], 0
    // Predicated region
    $region2: #{tpu_custom_call.1} parent=1 // pred_check
      _
    $region3: #{tpu_custom_call.1} parent=1 // pred_check_branch
      %12 = sbr.rel (0) target = $region5
    $region4: #{tpu_custom_call.1} parent=1 // pred_region
      _
    $region5: #{tpu_custom_call.1} parent=1 // pred_fallthru
      _
    // Predicated region
    $region6: #{tpu_custom_call.1} parent=1 // pred_check
      _
    $region7: #{tpu_custom_call.1} parent=1 // pred_check_branch
      %14 = sbr.rel (0) target = $region9
    $region8: #{tpu_custom_call.1} parent=1 // pred_region
      %s16 = ssub.s32 128, 128
      %17 = vsyncadd [#allocation3], %s16
      %s19 = sshll.u32 [#allocation2], 4
      %s20 = int_to_ptr.vmem [resolvable:$true] %s19
      %22 = dma.hbm_to_vmem [thread:$0]  %s1, 128, %s20, [#allocation3]
    $region9: #{tpu_custom_call.1} parent=1 // pred_fallthru
      _
    // Predicated region
    $region10: #{tpu_custom_call.1} parent=1 // pred_check
      _
    $region11: #{tpu_custom_call.1} parent=1 // pred_check_branch
      %24 = sbr.rel (0) target = $region13
    $region12: #{tpu_custom_call.1} parent=1 // pred_region
      _
    $region13: #{tpu_custom_call.1} parent=1 // pred_fallthru
      _
    // Predicated region
    $region14: #{tpu_custom_call.1} parent=1 // pred_check
      _
    $region15: #{tpu_custom_call.1} parent=1 // pred_check_branch
      %26 = sbr.rel (0) target = $region17
    $region16: #{tpu_custom_call.1} parent=1 // pred_region
      _
    $region17: #{tpu_custom_call.1} parent=1 // pred_fallthru
      _
    // Predicated region
    $region18: #{tpu_custom_call.1} parent=1 // pred_check
      _
    $region19: #{tpu_custom_call.1} parent=1 // pred_check_branch
      %28 = sbr.rel (0) target = $region21
    $region20: #{tpu_custom_call.1} parent=1 // pred_region
      %29 = dma.done [#allocation3], 128
    $region21: #{tpu_custom_call.1} parent=1 // pred_fallthru
      _
    %v30 = vld [vmem:[%s0] sm:$0xff]
    %v31 = vld [vmem:[#allocation2] sm:$0xff]
    %v32 = vld [vmem:[%s2] sm:$0x1]
    %v33 = vld [vmem:[%s3] sm:$0xff]
    %35 = vrot.lane.b32.xlu0 %v31, 32
    %v36 = vpop.permute.xlu0 %35
    %38 = vrot.lane.b32.xlu0 %v31, 64
    %v39 = vpop.permute.xlu0 %38
    %41 = vrot.lane.b32.xlu0 %v31, 96
    %v42 = vpop.permute.xlu0 %41
    %vm44 = vcmask 261120
    %v45 = vsel %vm44, %v31, %v36
    %vm46 = vcmask 523264
    %v47 = vsel %vm46, %v45, %v39
    %vm48 = vcmask 785408
    %v49 = vsel %vm48, %v47, %v42
    %v51 = vlaneseq
    %v52 = vshrl.u32 %v51, 7
    %v53 = vsub.s32 0, %v52
    %v54 = vrot.slane %v32, %v53
    %v56 = vsub.f32 %v54, %v49
    %v57 = vmul.f32 %v56, %v56
    %v58 = vlaneseq
    %v59 = vshrl.u32 %v58, 7
    %v60 = vadd.s32 %v59, 8
    %v61 = vadd.s32 %v59, 16
    %v62 = vadd.s32 %v59, 24
    %v63 = vadd.s32 %v59, 32
    %v64 = vadd.s32 %v59, 40
    %v65 = vadd.s32 %v59, 48
    %v66 = vadd.s32 %v59, 56
    %v67 = vadd.s32 %v59, 64
    %v68 = vadd.s32 %v59, 72
    %v69 = vadd.s32 %v59, 80
    %v70 = vadd.s32 %v59, 88
    %v71 = vadd.s32 %v59, 96
    %v72 = vadd.s32 %v59, 104
    %v73 = vadd.s32 %v59, 112
    %v74 = vadd.s32 %v59, 120
    %v75 = vlaneseq
    %v76 = vand.u32 %v75, 127
    %v77 = vmul.u32 %v76, 2
    %vm78 = vcmp.eq.s32.totalorder %v59, %v77
    %vm79 = vcmp.eq.s32.totalorder %v60, %v77
    %vm80 = vcmp.eq.s32.totalorder %v61, %v77
    %vm81 = vcmp.eq.s32.totalorder %v62, %v77
    %vm82 = vcmp.eq.s32.totalorder %v63, %v77
    %vm83 = vcmp.eq.s32.totalorder %v64, %v77
    %vm84 = vcmp.eq.s32.totalorder %v65, %v77
    %vm85 = vcmp.eq.s32.totalorder %v66, %v77
    %vm86 = vcmp.eq.s32.totalorder %v67, %v77
    %vm87 = vcmp.eq.s32.totalorder %v68, %v77
    %vm88 = vcmp.eq.s32.totalorder %v69, %v77
    %vm89 = vcmp.eq.s32.totalorder %v70, %v77
    %vm90 = vcmp.eq.s32.totalorder %v71, %v77
    %vm91 = vcmp.eq.s32.totalorder %v72, %v77
    %vm92 = vcmp.eq.s32.totalorder %v73, %v77
    %vm93 = vcmp.eq.s32.totalorder %v74, %v77
    %v94 = vadd.s32 %v77, 1
    %vm95 = vcmp.eq.s32.totalorder %v59, %v94
    %vm96 = vcmp.eq.s32.totalorder %v60, %v94
    %vm97 = vcmp.eq.s32.totalorder %v61, %v94
    %vm98 = vcmp.eq.s32.totalorder %v62, %v94
    %vm99 = vcmp.eq.s32.totalorder %v63, %v94
    %vm100 = vcmp.eq.s32.totalorder %v64, %v94
    %vm101 = vcmp.eq.s32.totalorder %v65, %v94
    %vm102 = vcmp.eq.s32.totalorder %v66, %v94
    %vm103 = vcmp.eq.s32.totalorder %v67, %v94
    %vm104 = vcmp.eq.s32.totalorder %v68, %v94
    %vm105 = vcmp.eq.s32.totalorder %v69, %v94
    %vm106 = vcmp.eq.s32.totalorder %v70, %v94
    %vm107 = vcmp.eq.s32.totalorder %v71, %v94
    %vm108 = vcmp.eq.s32.totalorder %v72, %v94
    %vm109 = vcmp.eq.s32.totalorder %v73, %v94
    %vm110 = vcmp.eq.s32.totalorder %v74, %v94
    %vm111 = vmor %vm78, %vm95
    %vm112 = vmor %vm79, %vm96
    %vm113 = vmor %vm80, %vm97
    %vm114 = vmor %vm81, %vm98
    %vm115 = vmor %vm82, %vm99
    %vm116 = vmor %vm83, %vm100
    %vm117 = vmor %vm84, %vm101
    %vm118 = vmor %vm85, %vm102
    %vm119 = vmor %vm86, %vm103
    %vm120 = vmor %vm87, %vm104
    %vm121 = vmor %vm88, %vm105
    %vm122 = vmor %vm89, %vm106
    %vm123 = vmor %vm90, %vm107
    %vm124 = vmor %vm91, %vm108
    %vm125 = vmor %vm92, %vm109
    %vm126 = vmor %vm93, %vm110
    %v127 = vsel %vm111, 1, 0
    %v128 = vsel %vm112, 1, 0
    %v129 = vsel %vm113, 1, 0
    %v130 = vsel %vm114, 1, 0
    %v131 = vsel %vm115, 1, 0
    %v132 = vsel %vm116, 1, 0
    %v133 = vsel %vm117, 1, 0
    %v134 = vsel %vm118, 1, 0
    %v135 = vsel %vm119, 1, 0
    %v136 = vsel %vm120, 1, 0
    %v137 = vsel %vm121, 1, 0
    %v138 = vsel %vm122, 1, 0
    %v139 = vsel %vm123, 1, 0
    %v140 = vsel %vm124, 1, 0
    %v141 = vsel %vm125, 1, 0
    %v142 = vsel %vm126, 1, 0
    %v143 = vcvt.s32.f32 %v127
    %v144 = vcvt.s32.f32 %v128
    %v145 = vcvt.s32.f32 %v129
    %v146 = vcvt.s32.f32 %v130
    %v147 = vcvt.s32.f32 %v131
    %v148 = vcvt.s32.f32 %v132
    %v149 = vcvt.s32.f32 %v133
    %v150 = vcvt.s32.f32 %v134
    %v151 = vcvt.s32.f32 %v135
    %v152 = vcvt.s32.f32 %v136
    %v153 = vcvt.s32.f32 %v137
    %v154 = vcvt.s32.f32 %v138
    %v155 = vcvt.s32.f32 %v139
    %v156 = vcvt.s32.f32 %v140
    %v157 = vcvt.s32.f32 %v141
    %v158 = vcvt.s32.f32 %v142
    %159 = vmatprep.subr.mxu0 0.0
    %160 = vmatpush1.msra.mxu0 %v158
    %161 = vmatprep.subr.mxu0 0.0
    %162 = vmatpush1.msra.mxu0 %v157
    %163 = vmatprep.subr.mxu0 0.0
    %164 = vmatpush1.msra.mxu0 %v156
    %165 = vmatprep.subr.mxu0 0.0
    %166 = vmatpush1.msra.mxu0 %v155
    %167 = vmatprep.subr.mxu0 0.0
    %168 = vmatpush1.msra.mxu0 %v154
    %169 = vmatprep.subr.mxu0 0.0
    %170 = vmatpush1.msra.mxu0 %v153
    %171 = vmatprep.subr.mxu0 0.0
    %172 = vmatpush1.msra.mxu0 %v152
    %173 = vmatprep.subr.mxu0 0.0
    %174 = vmatpush1.msra.mxu0 %v151
    %175 = vmatprep.subr.mxu0 0.0
    %176 = vmatpush1.msra.mxu0 %v150
    %177 = vmatprep.subr.mxu0 0.0
    %178 = vmatpush1.msra.mxu0 %v149
    %179 = vmatprep.subr.mxu0 0.0
    %180 = vmatpush1.msra.mxu0 %v148
    %181 = vmatprep.subr.mxu0 0.0
    %182 = vmatpush1.msra.mxu0 %v147
    %183 = vmatprep.subr.mxu0 0.0
    %184 = vmatpush1.msra.mxu0 %v146
    %185 = vmatprep.subr.mxu0 0.0
    %186 = vmatpush1.msra.mxu0 %v145
    %187 = vmatprep.subr.mxu0 0.0
    %188 = vmatpush1.msra.mxu0 %v144
    %189 = vmatprep.subr.mxu0 0.0
    %190 = vmatpush1.msra.mxu0 %v143
    %191 = vmatprep.subr.mxu0 0.0
    %192 = vmatpush2.msra.mxu0 0.0
    %193 = vmatprep.subr.mxu0 0.0
    %194 = vmatpush2.msra.mxu0 0.0
    %195 = vmatprep.subr.mxu0 0.0
    %196 = vmatpush2.msra.mxu0 0.0
    %197 = vmatprep.subr.mxu0 0.0
    %198 = vmatpush2.msra.mxu0 0.0
    %199 = vmatprep.subr.mxu0 0.0
    %200 = vmatpush2.msra.mxu0 0.0
    %201 = vmatprep.subr.mxu0 0.0
    %202 = vmatpush2.msra.mxu0 0.0
    %203 = vmatprep.subr.mxu0 0.0
    %204 = vmatpush2.msra.mxu0 0.0
    %205 = vmatprep.subr.mxu0 0.0
    %206 = vmatpush2.msra.mxu0 0.0
    %207 = vmatprep.subr.mxu0 0.0
    %208 = vmatpush2.msra.mxu0 0.0
    %209 = vmatprep.subr.mxu0 0.0
    %210 = vmatpush2.msra.mxu0 0.0
    %211 = vmatprep.subr.mxu0 0.0
    %212 = vmatpush2.msra.mxu0 0.0
    %213 = vmatprep.subr.mxu0 0.0
    %214 = vmatpush2.msra.mxu0 0.0
    %215 = vmatprep.subr.mxu0 0.0
    %216 = vmatpush2.msra.mxu0 0.0
    %217 = vmatprep.subr.mxu0 0.0
    %218 = vmatpush2.msra.mxu0 0.0
    %219 = vmatprep.subr.mxu0 0.0
    %220 = vmatpush2.msra.mxu0 0.0
    %221 = vmatprep.subr.mxu0 0.0
    %222 = vmatpush2.msra.mxu0 0.0
    %223 = vmatprep.mubr.f32.mxu0 0.0
    %224 = vmatmul.mubr.f32.gmra.mxu0 %v57
    %v225 = vpop.f32.mrf.mxu0
    %v226 = vadd.f32 0.0, %v225
    %v227 = vpop.f32.mrf.mxu0
    %228 = vdwg.mxu0
    %v229 = vrsqrt.pop %v226
    %v230 = vmul.f32 %v226, %v229
    %vm231 = vcmp.eq.f32.partialorder %v226, inf
    %v232 = vsel %vm231, %v226, %v230
    %vm233 = vcmp.eq.f32.partialorder %v226, 0.0
    %v234 = vand.u32 %v226, 2147483648
    %v235 = vsel %vm233, %v234, %v232
    %v236 = vmul.u32 %v76, 16
    %vm237 = vcmp.ge.s32.totalorder %v59, %v236
    %vm238 = vcmp.ge.s32.totalorder %v60, %v236
    %vm239 = vcmp.ge.s32.totalorder %v61, %v236
    %vm240 = vcmp.ge.s32.totalorder %v62, %v236
    %vm241 = vcmp.ge.s32.totalorder %v63, %v236
    %vm242 = vcmp.ge.s32.totalorder %v64, %v236
    %vm243 = vcmp.ge.s32.totalorder %v65, %v236
    %vm244 = vcmp.ge.s32.totalorder %v66, %v236
    %v245 = vadd.s32 %v76, 1
    %v246 = vmul.u32 %v245, 16
    %vm247 = vcmp.lt.s32.totalorder %v59, %v246
    %vm248 = vcmp.lt.s32.totalorder %v60, %v246
    %vm249 = vcmp.lt.s32.totalorder %v61, %v246
    %vm250 = vcmp.lt.s32.totalorder %v62, %v246
    %vm251 = vcmp.lt.s32.totalorder %v63, %v246
    %vm252 = vcmp.lt.s32.totalorder %v64, %v246
    %vm253 = vcmp.lt.s32.totalorder %v65, %v246
    %vm254 = vcmp.lt.s32.totalorder %v66, %v246
    %vm255 = vmand %vm237, %vm247
    %vm256 = vmand %vm238, %vm248
    %vm257 = vmand %vm239, %vm249
    %vm258 = vmand %vm240, %vm250
    %vm259 = vmand %vm241, %vm251
    %vm260 = vmand %vm242, %vm252
    %vm261 = vmand %vm243, %vm253
    %vm262 = vmand %vm244, %vm254
    %v263 = vsel %vm255, 1, 0
    %v264 = vsel %vm256, 1, 0
    %v265 = vsel %vm257, 1, 0
    %v266 = vsel %vm258, 1, 0
    %v267 = vsel %vm259, 1, 0
    %v268 = vsel %vm260, 1, 0
    %v269 = vsel %vm261, 1, 0
    %v270 = vsel %vm262, 1, 0
    %v271 = vcvt.s32.f32 %v263
    %v272 = vcvt.s32.f32 %v264
    %v273 = vcvt.s32.f32 %v265
    %v274 = vcvt.s32.f32 %v266
    %v275 = vcvt.s32.f32 %v267
    %v276 = vcvt.s32.f32 %v268
    %v277 = vcvt.s32.f32 %v269
    %v278 = vcvt.s32.f32 %v270
    %v280 = vsel %vm46, %v235, 0
    %282 = vmatprep.subr.mxu0 0.0
    %283 = vmatpush1.msra.mxu0 0.0
    %284 = vmatprep.subr.mxu0 0.0
    %285 = vmatpush1.msra.mxu0 0.0
    %286 = vmatprep.subr.mxu0 0.0
    %287 = vmatpush1.msra.mxu0 0.0
    %288 = vmatprep.subr.mxu0 0.0
    %289 = vmatpush1.msra.mxu0 0.0
    %290 = vmatprep.subr.mxu0 0.0
    %291 = vmatpush1.msra.mxu0 0.0
    %292 = vmatprep.subr.mxu0 0.0
    %293 = vmatpush1.msra.mxu0 0.0
    %294 = vmatprep.subr.mxu0 0.0
    %295 = vmatpush1.msra.mxu0 0.0
    %296 = vmatprep.subr.mxu0 0.0
    %297 = vmatpush1.msra.mxu0 0.0
    %298 = vmatprep.subr.mxu0 0.0
    %299 = vmatpush1.msra.mxu0 %v278
    %300 = vmatprep.subr.mxu0 0.0
    %301 = vmatpush1.msra.mxu0 %v277
    %302 = vmatprep.subr.mxu0 0.0
    %303 = vmatpush1.msra.mxu0 %v276
    %304 = vmatprep.subr.mxu0 0.0
    %305 = vmatpush1.msra.mxu0 %v275
    %306 = vmatprep.subr.mxu0 0.0
    %307 = vmatpush1.msra.mxu0 %v274
    %308 = vmatprep.subr.mxu0 0.0
    %309 = vmatpush1.msra.mxu0 %v273
    %310 = vmatprep.subr.mxu0 0.0
    %311 = vmatpush1.msra.mxu0 %v272
    %312 = vmatprep.subr.mxu0 0.0
    %313 = vmatpush1.msra.mxu0 %v271
    %314 = vmatprep.subr.mxu0 0.0
    %315 = vmatpush2.msra.mxu0 0.0
    %316 = vmatprep.subr.mxu0 0.0
    %317 = vmatpush2.msra.mxu0 0.0
    %318 = vmatprep.subr.mxu0 0.0
    %319 = vmatpush2.msra.mxu0 0.0
    %320 = vmatprep.subr.mxu0 0.0
    %321 = vmatpush2.msra.mxu0 0.0
    %322 = vmatprep.subr.mxu0 0.0
    %323 = vmatpush2.msra.mxu0 0.0
    %324 = vmatprep.subr.mxu0 0.0
    %325 = vmatpush2.msra.mxu0 0.0
    %326 = vmatprep.subr.mxu0 0.0
    %327 = vmatpush2.msra.mxu0 0.0
    %328 = vmatprep.subr.mxu0 0.0
    %329 = vmatpush2.msra.mxu0 0.0
    %330 = vmatprep.subr.mxu0 0.0
    %331 = vmatpush2.msra.mxu0 0.0
    %332 = vmatprep.subr.mxu0 0.0
    %333 = vmatpush2.msra.mxu0 0.0
    %334 = vmatprep.subr.mxu0 0.0
    %335 = vmatpush2.msra.mxu0 0.0
    %336 = vmatprep.subr.mxu0 0.0
    %337 = vmatpush2.msra.mxu0 0.0
    %338 = vmatprep.subr.mxu0 0.0
    %339 = vmatpush2.msra.mxu0 0.0
    %340 = vmatprep.subr.mxu0 0.0
    %341 = vmatpush2.msra.mxu0 0.0
    %342 = vmatprep.subr.mxu0 0.0
    %343 = vmatpush2.msra.mxu0 0.0
    %344 = vmatprep.subr.mxu0 0.0
    %345 = vmatpush2.msra.mxu0 0.0
    %346 = vmatprep.mubr.f32.mxu0 0.0
    %347 = vmatmul.mubr.f32.gmra.mxu0 %v280
    %v348 = vpop.f32.mrf.mxu0
    %v349 = vadd.f32 0.0, %v348
    %v350 = vpop.f32.mrf.mxu0
    %351 = vdwg.mxu0
    %vm352 = vcmask 31744
    %v353 = vsel %vm352, %v349, inf
    %354 = vmin.index.xlane.f32.xlu0 %v353
    %v355 = vpop.xlane.xlu0 %354
    %vm356 = vcmp.eq.s32.totalorder %v76, %v355
    %v357 = vsel %vm356, %v33, 0.0
    %v358 = vsel %vm352, %v357, 0.0
    %359 = vadd.xlane.f32.xlu0 %v358
    %v360 = vpop.xlane.xlu0 %359
    %v361 = vsub.f32 0.0, %v360
    %v362 = vmul.u32 %v355, 32
    %vm363 = vcmp.ge.s32.totalorder %v76, %v362
    %v364 = vadd.s32 %v362, 32
    %vm365 = vcmp.lt.s32.totalorder %v76, %v364
    %vm366 = vmand %vm363, %vm365
    %v367 = vsub.f32 %v49, %v30
    %v368 = vsub.f32 %v367, %v54
    %v369 = vmul.f32 %v368, %v368
    %v370 = vsel %vm366, %v369, 0.0
    %371 = vadd.xlane.f32.xlu0 %v370
    %v372 = vpop.xlane.xlu0 %371
    %v373 = vrcp.pop 16.0
    %v374 = vmul.f32 %v372, %v373
    %v375 = vmul.f32 %v361, 0.2
    %v376 = vadd.f32 %v374, %v375
    %s377 = smul.u32 0, 8
    %v378 = vstv %s377
    %v379 = vadd.s32 %v378, %v59
    %vm380 = vcmp.lt.s32.totalorder %v379, 8
    %v381 = vsel %vm380, %v376, 0.0
    %vm382 = vcmask 7168
    %v383 = vsel %vm382, %v381, 0.0
    %384 = vadd.xlane.f32.xlu0 %v383
    %v385 = vpop.xlane.xlu0 %384
    %v386 = vrot.slane %v385, 4
    %v387 = vadd.f32 %v385, %v386
    %v388 = vrot.slane %v387, 2
    %v389 = vadd.f32 %v387, %v388
    %v390 = vrot.slane %v389, 1
    %v391 = vadd.f32 %v389, %v390
    %s392 = vtos %v391
    %v393 = vstv %s392
    %394 = vst [vmem:[#allocation5] sm:$0xff] %v393
    // Predicated region
    $region22: #{tpu_custom_call.1} parent=1 // pred_check
      _
    $region23: #{tpu_custom_call.1} parent=1 // pred_check_branch
      %396 = sbr.rel (0) target = $region25
    $region24: #{tpu_custom_call.1} parent=1 // pred_region
      %s398 = ssub.s32 128, 128
      %399 = vsyncadd [#allocation4], %s398
      %s401 = sshll.u32 [#allocation5], 4
      %s402 = int_to_ptr.vmem [resolvable:$true] %s401
      %404 = dma.vmem_to_hbm [thread:$0]  %s402, 128, %s4, [#allocation4]
    $region25: #{tpu_custom_call.1} parent=1 // pred_fallthru
      _
    // Predicated region
    $region26: #{tpu_custom_call.1} parent=1 // pred_check
      _
    $region27: #{tpu_custom_call.1} parent=1 // pred_check_branch
      %406 = sbr.rel (0) target = $region29
    $region28: #{tpu_custom_call.1} parent=1 // pred_region
      %407 = dma.done [#allocation4], 128
    $region29: #{tpu_custom_call.1} parent=1 // pred_fallthru
      _
    %408 = vsyncpa [#allocation3], 1
    %409 = vsyncpa [#allocation4], 1

</llo_original>
